<compile_context>
chip_gen: v5e
topology: v5e:2x2
jax: 0.10.0
libtpu: 0.0.40
codegen_flags: <defaults>
</compile_context>

<pallas_src>
import jax
import jax.numpy as jnp
from jax.experimental import pallas as pl
from jax.experimental.pallas import tpu as pltpu


def _round_up(x, m):
    return (x + m - 1) // m * m


# ----------------------------- Pallas kernel -------------------------------
def mlp_kernel(x_ref, w1_ref, b1_ref, w2_ref, b2_ref, w3_ref, b3_ref, o_ref):
    # layer 1: Linear (bf16 MXU, f32 accumulate) + bias/ReLU in f32.
    # Dropout = identity (eval semantics).
    h = jnp.dot(x_ref[...], w1_ref[...], preferred_element_type=jnp.float32)
    h = jnp.maximum(h + b1_ref[...], 0.0)
    # layer 2: Linear + ReLU
    h = jnp.dot(h.astype(jnp.bfloat16), w2_ref[...],
                preferred_element_type=jnp.float32)
    h = jnp.maximum(h + b2_ref[...], 0.0)
    # output layer: Linear (lane-padded to >=128 columns, no activation)
    o = jnp.dot(h.astype(jnp.bfloat16), w3_ref[...],
                preferred_element_type=jnp.float32)
    o_ref[...] = (o + b3_ref[...]).astype(o_ref.dtype)


# ------------------------------- wrapper ------------------------------------
def mlp_forward(x, max_len, dict_size, kernel_params, out_dim, *, block_batch=512):
    """x: [batch, seq_len, dict_size] (seq_len <= max_len). Returns [batch, out_dim] f32."""
    B, S, K = x.shape
    assert K == dict_size and S <= max_len
    w1, b1, w2, b2, w3p, b3p = kernel_params
    H = w2.shape[0]
    n_pad = w3p.shape[1]

    # One-hot zero-padding trick: the padded sequence positions only ever
    # multiply zero activations, so x_pad @ W1 == x_flat @ W1[:S*K].
    in_dim = S * K
    x_flat = x.reshape(B, in_dim).astype(jnp.bfloat16)
    w1a = w1[:in_dim, :]

    # Batch tiling (tm rows per grid step).  v7x note: with very large hidden
    # dims, halve block_batch (64 MiB VMEM) or stream W2 over a K grid axis.
    tm = min(block_batch, _round_up(B, 8))
    Bp = _round_up(B, tm)
    if Bp != B:
        x_flat = jnp.pad(x_flat, ((0, Bp - B), (0, 0)))

    def _nbytes(a):
        return a.size * a.dtype.itemsize

    weight_bytes = sum(_nbytes(a) for a in (w1a, b1, w2, b2, w3p, b3p))
    vmem_need = (weight_bytes
                 + 2 * (tm * in_dim * 2 + tm * n_pad * 4)  # double-buffered x/out tiles
                 + 2 * tm * H * 4)                          # f32 intermediates
    vmem_limit = int(min(max(2 * vmem_need, 16 * 1024 ** 2), 64 * 1024 ** 2))

    cost = pl.CostEstimate(
        flops=2 * Bp * (in_dim * H + H * H + H * n_pad),
        transcendentals=0,
        bytes_accessed=Bp * in_dim * 2 + weight_bytes + Bp * n_pad * 4,
    )

    grid = (Bp // tm,)
    out = pl.pallas_call(
        mlp_kernel,
        out_shape=jax.ShapeDtypeStruct((Bp, n_pad), jnp.float32),
        grid_spec=pltpu.PrefetchScalarGridSpec(
            num_scalar_prefetch=0,
            grid=grid,
            in_specs=[
                pl.BlockSpec((tm, in_dim), lambda i: (i, 0)),   # x: streamed per grid step
                pl.BlockSpec((in_dim, H), lambda i: (0, 0)),    # weights: VMEM-resident
                pl.BlockSpec((1, H), lambda i: (0, 0)),
                pl.BlockSpec((H, H), lambda i: (0, 0)),
                pl.BlockSpec((1, H), lambda i: (0, 0)),
                pl.BlockSpec((H, n_pad), lambda i: (0, 0)),
                pl.BlockSpec((1, n_pad), lambda i: (0, 0)),
            ],
            out_specs=pl.BlockSpec((tm, n_pad), lambda i: (i, 0)),
        ),
        compiler_params=pltpu.CompilerParams(
            dimension_semantics=("parallel",),
            vmem_limit_bytes=vmem_limit,
        ),
        cost_estimate=cost,
    )(x_flat, w1a, b1, w2, b2, w3p, b3p)

    return out[:B, :out_dim]


# --------------------------- parameter init --------------------------------
def init_params(key, init_layer_depth, hidden_dim, num_layer, out_dim):
    """Deterministic PyTorch-style init; weights stored [in, out], biases [1, out], f32."""
    assert num_layer == 2, "this script wires up the num_layer=2 config"
    # TODO(synk): generalize the fused kernel to arbitrary num_layer (loop over
    # a stack of resident hidden weights) if a deeper config is needed.
    ks = jax.random.split(key, 6)

    def lin(kw, kb, fan_in, fan_out):
        bound = 1.0 / jnp.sqrt(fan_in)
        w = jax.random.uniform(kw, (fan_in, fan_out), jnp.float32, -bound, bound)
        b = jax.random.uniform(kb, (1, fan_out), jnp.float32, -bound, bound)
        return w, b

    w1, b1 = lin(ks[0], ks[1], init_layer_depth, hidden_dim)
    w2, b2 = lin(ks[2], ks[3], hidden_dim, hidden_dim)
    w3, b3 = lin(ks[4], ks[5], hidden_dim, out_dim)
    return (w1, b1, w2, b2, w3, b3)


def prepare_kernel_params(params, out_dim, lane=128):
    """One-time cast of weights to bf16 and lane-padding of the output projection."""
    w1, b1, w2, b2, w3, b3 = params
    n_pad = max(lane, _round_up(out_dim, lane))
    w3p = jnp.zeros((w3.shape[0], n_pad), jnp.float32).at[:, :out_dim].set(w3)
    b3p = jnp.zeros((1, n_pad), jnp.float32).at[:, :out_dim].set(b3)
    return (
        w1.astype(jnp.bfloat16), b1.astype(jnp.float32),
        w2.astype(jnp.bfloat16), b2.astype(jnp.float32),
        w3p.astype(jnp.bfloat16), b3p.astype(jnp.float32),
    )


# ------------------------------- driver -------------------------------------
if __name__ == "__main__":
    # config: max_len=8, dict_size=4 -> init_layer_depth=32, hidden_dim=32,
    # num_layer=2, num_output=1, batch=2, seq_len_in_batch=6
    batch, seq_len = 2, 6
    max_len, dict_size = 8, 4
    hidden_dim, num_layer, out_dim = 32, 2, 1

    key = jax.random.PRNGKey(0)
    kx, kp = jax.random.split(key)

    # one-hot input of shape [batch, seq_len, dict_size]
    tokens = jax.random.randint(kx, (batch, seq_len), 0, dict_size)
    x = jax.nn.one_hot(tokens, dict_size, dtype=jnp.float32)

    params = init_params(kp, max_len * dict_size, hidden_dim, num_layer, out_dim)
    kparams = prepare_kernel_params(params, out_dim)

    out = mlp_forward(x, max_len, dict_size, kparams, out_dim)
    out = jax.block_until_ready(out)
    assert out.shape == (batch, out_dim)

    # (a) exact module semantics in f32 (loose tol: kernel uses bf16 weights)
    x_pad = jnp.zeros((batch, max_len, dict_size), jnp.float32).at[:, :seq_len, :].set(x)
    xf = x_pad.reshape(batch, -1)
    w1, b1, w2, b2, w3, b3 = params
    ref32 = jnp.maximum(xf @ w1 + b1, 0.0)
    ref32 = jnp.maximum(ref32 @ w2 + b2, 0.0)
    ref32 = ref32 @ w3 + b3
    assert jnp.allclose(out, ref32, atol=5e-2, rtol=5e-2)

    # (b) bf16-matched reference (same numerics as the kernel)
    w1b, b1b, w2b, b2b, w3b, b3b = kparams
    h = jnp.dot(xf.astype(jnp.bfloat16), w1b, preferred_element_type=jnp.float32)
    h = jnp.maximum(h + b1b, 0.0)
    h = jnp.dot(h.astype(jnp.bfloat16), w2b, preferred_element_type=jnp.float32)
    h = jnp.maximum(h + b2b, 0.0)
    refb = (jnp.dot(h.astype(jnp.bfloat16), w3b, preferred_element_type=jnp.float32)
            + b3b)[:, :out_dim]
    assert jnp.allclose(out, refb, atol=1e-3, rtol=1e-3)

    print("KERNEL_OK")
</pallas_src>

<mosaic_0001>
module attributes {stable_mosaic.version = 11 : i64} {
  func.func @mlp_kernel(%arg0: i32, %arg1: memref<8x24xbf16, #tpu.memory_space<vmem>>, %arg2: memref<24x32xbf16, #tpu.memory_space<vmem>>, %arg3: memref<1x32xf32, #tpu.memory_space<vmem>>, %arg4: memref<32x32xbf16, #tpu.memory_space<vmem>>, %arg5: memref<1x32xf32, #tpu.memory_space<vmem>>, %arg6: memref<32x128xbf16, #tpu.memory_space<vmem>>, %arg7: memref<1x128xf32, #tpu.memory_space<vmem>>, %arg8: memref<8x128xf32, #tpu.memory_space<vmem>>) attributes {dimension_semantics = [#tpu.dimension_semantics<parallel>], iteration_bounds = array<i64: 1>, scalar_prefetch = 0 : i64, scratch_operands = 0 : i64, tpu.core_type = #tpu.core_type<tc>, window_params = [{transform_indices = @transform_0, window_bounds = array<i64: 8, 24>}, {pipeline_mode = #tpu.pipeline_mode<synchronous>, transform_indices = @transform_1, window_bounds = array<i64: 24, 32>}, {pipeline_mode = #tpu.pipeline_mode<synchronous>, transform_indices = @transform_2, window_bounds = array<i64: 1, 32>}, {pipeline_mode = #tpu.pipeline_mode<synchronous>, transform_indices = @transform_3, window_bounds = array<i64: 32, 32>}, {pipeline_mode = #tpu.pipeline_mode<synchronous>, transform_indices = @transform_4, window_bounds = array<i64: 1, 32>}, {pipeline_mode = #tpu.pipeline_mode<synchronous>, transform_indices = @transform_5, window_bounds = array<i64: 32, 128>}, {pipeline_mode = #tpu.pipeline_mode<synchronous>, transform_indices = @transform_6, window_bounds = array<i64: 1, 128>}, {transform_indices = @transform_7, window_bounds = array<i64: 8, 128>}]} {
    %c0 = arith.constant 0 : index
    %c0_0 = arith.constant 0 : index
    %0 = vector.load %arg1[%c0, %c0_0] : memref<8x24xbf16, #tpu.memory_space<vmem>>, vector<8x24xbf16>
    %c0_1 = arith.constant 0 : index
    %c0_2 = arith.constant 0 : index
    %1 = vector.load %arg2[%c0_1, %c0_2] : memref<24x32xbf16, #tpu.memory_space<vmem>>, vector<24x32xbf16>
    %cst = arith.constant dense<0.000000e+00> : vector<8x32xf32>
    %2 = tpu.matmul %0, %1, %cst {dimension_numbers = #tpu.dot_dimension_numbers<[1], [0], [0], [1], [0, 0, 1, 1], [], []>} : vector<8x24xbf16>, vector<24x32xbf16>, vector<8x32xf32> -> vector<8x32xf32>
    %c0_3 = arith.constant 0 : index
    %c0_4 = arith.constant 0 : index
    %3 = vector.load %arg3[%c0_3, %c0_4] : memref<1x32xf32, #tpu.memory_space<vmem>>, vector<1x32xf32>
    %4 = vector.broadcast %3 : vector<1x32xf32> to vector<8x32xf32>
    %5 = arith.addf %2, %4 : vector<8x32xf32>
    %cst_5 = arith.constant 0.000000e+00 : f32
    %6 = vector.broadcast %cst_5 : f32 to vector<8x32xf32>
    %7 = arith.maximumf %5, %6 : vector<8x32xf32>
    %8 = arith.truncf %7 : vector<8x32xf32> to vector<8x32xbf16>
    %c0_6 = arith.constant 0 : index
    %c0_7 = arith.constant 0 : index
    %9 = vector.load %arg4[%c0_6, %c0_7] : memref<32x32xbf16, #tpu.memory_space<vmem>>, vector<32x32xbf16>
    %cst_8 = arith.constant dense<0.000000e+00> : vector<8x32xf32>
    %10 = tpu.matmul %8, %9, %cst_8 {dimension_numbers = #tpu.dot_dimension_numbers<[1], [0], [0], [1], [0, 0, 1, 1], [], []>} : vector<8x32xbf16>, vector<32x32xbf16>, vector<8x32xf32> -> vector<8x32xf32>
    %c0_9 = arith.constant 0 : index
    %c0_10 = arith.constant 0 : index
    %11 = vector.load %arg5[%c0_9, %c0_10] : memref<1x32xf32, #tpu.memory_space<vmem>>, vector<1x32xf32>
    %12 = vector.broadcast %11 : vector<1x32xf32> to vector<8x32xf32>
    %13 = arith.addf %10, %12 : vector<8x32xf32>
    %cst_11 = arith.constant 0.000000e+00 : f32
    %14 = vector.broadcast %cst_11 : f32 to vector<8x32xf32>
    %15 = arith.maximumf %13, %14 : vector<8x32xf32>
    %16 = arith.truncf %15 : vector<8x32xf32> to vector<8x32xbf16>
    %c0_12 = arith.constant 0 : index
    %c0_13 = arith.constant 0 : index
    %17 = vector.load %arg6[%c0_12, %c0_13] : memref<32x128xbf16, #tpu.memory_space<vmem>>, vector<32x128xbf16>
    %cst_14 = arith.constant dense<0.000000e+00> : vector<8x128xf32>
    %18 = tpu.matmul %16, %17, %cst_14 {dimension_numbers = #tpu.dot_dimension_numbers<[1], [0], [0], [1], [0, 0, 1, 1], [], []>} : vector<8x32xbf16>, vector<32x128xbf16>, vector<8x128xf32> -> vector<8x128xf32>
    %c0_15 = arith.constant 0 : index
    %c0_16 = arith.constant 0 : index
    %19 = vector.load %arg7[%c0_15, %c0_16] : memref<1x128xf32, #tpu.memory_space<vmem>>, vector<1x128xf32>
    %20 = vector.broadcast %19 : vector<1x128xf32> to vector<8x128xf32>
    %21 = arith.addf %18, %20 : vector<8x128xf32>
    %c0_17 = arith.constant 0 : index
    %c0_18 = arith.constant 0 : index
    %22 = vector.load %arg8[%c0_17, %c0_18] : memref<8x128xf32, #tpu.memory_space<vmem>>, vector<8x128xf32>
    tpu.vector_store %arg8[%c0_17, %c0_18], %21 {strides = array<i32>} : memref<8x128xf32, #tpu.memory_space<vmem>>, vector<8x128xf32>,
    return
  }
  func.func @transform_0(%arg0: i32) -> (i32, i32) {
    %c0_i32 = arith.constant 0 : i32
    %c0_i32_0 = arith.constant 0 : i32
    return %arg0, %c0_i32 : i32, i32
  }
  func.func @transform_1(%arg0: i32) -> (i32, i32) {
    %c0_i32 = arith.constant 0 : i32
    %c0_i32_0 = arith.constant 0 : i32
    %c0_i32_1 = arith.constant 0 : i32
    return %c0_i32, %c0_i32_0 : i32, i32
  }
  func.func @transform_2(%arg0: i32) -> (i32, i32) {
    %c0_i32 = arith.constant 0 : i32
    %c0_i32_0 = arith.constant 0 : i32
    %c0_i32_1 = arith.constant 0 : i32
    return %c0_i32, %c0_i32_0 : i32, i32
  }
  func.func @transform_3(%arg0: i32) -> (i32, i32) {
    %c0_i32 = arith.constant 0 : i32
    %c0_i32_0 = arith.constant 0 : i32
    %c0_i32_1 = arith.constant 0 : i32
    return %c0_i32, %c0_i32_0 : i32, i32
  }
  func.func @transform_4(%arg0: i32) -> (i32, i32) {
    %c0_i32 = arith.constant 0 : i32
    %c0_i32_0 = arith.constant 0 : i32
    %c0_i32_1 = arith.constant 0 : i32
    return %c0_i32, %c0_i32_0 : i32, i32
  }
  func.func @transform_5(%arg0: i32) -> (i32, i32) {
    %c0_i32 = arith.constant 0 : i32
    %c0_i32_0 = arith.constant 0 : i32
    %c0_i32_1 = arith.constant 0 : i32
    return %c0_i32, %c0_i32_0 : i32, i32
  }
  func.func @transform_6(%arg0: i32) -> (i32, i32) {
    %c0_i32 = arith.constant 0 : i32
    %c0_i32_0 = arith.constant 0 : i32
    %c0_i32_1 = arith.constant 0 : i32
    return %c0_i32, %c0_i32_0 : i32, i32
  }
  func.func @transform_7(%arg0: i32) -> (i32, i32) {
    %c0_i32 = arith.constant 0 : i32
    %c0_i32_0 = arith.constant 0 : i32
    return %arg0, %c0_i32 : i32, i32
  }
}

</mosaic_0001>

<llo_original>
// kernel: tpu_custom_call.1
$region0: #{tpu_custom_call.1}
  #allocation0 [shape = 'u32[]', space=smem, size = 0x4, offset = 0x4, fixed_abs, tag = 'smem constant byte address 0x4 - core index']
  #allocation1 [shape = 'u32[72,128]{1,0:T(1,128)}', space=vmem, size = 0x9000, scoped, tag = 'internal scratch']
  %s0 = inlined_call_operand.hbm [shape: bf16[8,24], index: 0, kind: input, shape index: {}]
  %s1 = inlined_call_operand.hbm [shape: bf16[24,32], index: 1, kind: input, shape index: {}]
  %s2 = inlined_call_operand.vmem [shape: f32[1,32], index: 2, kind: input, shape index: {}]
  %s3 = inlined_call_operand.hbm [shape: bf16[32,32], index: 3, kind: input, shape index: {}]
  %s4 = inlined_call_operand.vmem [shape: f32[1,32], index: 4, kind: input, shape index: {}]
  %s5 = inlined_call_operand.hbm [shape: bf16[32,128], index: 5, kind: input, shape index: {}]
  %s6 = inlined_call_operand.vmem [shape: f32[1,128], index: 6, kind: input, shape index: {}]
  %s7 = inlined_call_operand.hbm [shape: f32[8,128], index: 7, kind: output, shape index: {}]
  %s8 = sld [smem:[#allocation0]]
  $region54: #{tpu_custom_call.1} parent=0
    _
  %s10 = ssub.s32 1, %s8
  %s11 = scalar_select 0, %s10, %s8
  $region1: #{tpu_custom_call.1} parent=0
    #allocation2 [shape = 'u8[2048]{0}', space=vmem, size = 0x800, scoped, tag = 'input window, operand 0, single buffered']
    #allocation3 [shape = 's32[1]{0}', space=sflag, size = 0x4, scoped, tag = 'scoped memory for tpu_custom_call.1']
    #allocation4 [shape = 's32[1]{0}', space=sflag, size = 0x4, scoped, tag = 'scoped memory for tpu_custom_call.1']
    #allocation5 [shape = 'u8[6144]{0}', space=vmem, size = 0x1800, scoped, tag = 'input window, operand 1, single buffered']
    #allocation6 [shape = 's32[1]{0}', space=sflag, size = 0x4, scoped, tag = 'scoped memory for tpu_custom_call.1']
    #allocation7 [shape = 'u8[8192]{0}', space=vmem, size = 0x2000, scoped, tag = 'input window, operand 3, single buffered']
    #allocation8 [shape = 'u8[8192]{0}', space=vmem, size = 0x2000, scoped, tag = 'input window, operand 5, single buffered']
    #allocation9 [shape = 's32[1]{0}', space=sflag, size = 0x4, scoped, tag = 'scoped memory for tpu_custom_call.1']
    #allocation10 [shape = 'u8[4096]{0}', space=vmem, size = 0x1000, scoped, tag = 'output window, operand 0, single buffered']
    %12 = vsyncpa [#allocation3], 0
    %13 = vsyncpa [#allocation6], 0
    %14 = vsyncpa [#allocation9], 0
    %15 = vsyncpa [#allocation4], 0
    // Predicated region
    $region2: #{tpu_custom_call.1} parent=1 // pred_check
      _
    $region3: #{tpu_custom_call.1} parent=1 // pred_check_branch
      %17 = sbr.rel (0) target = $region5
    $region4: #{tpu_custom_call.1} parent=1 // pred_region
      %19 = vsyncadd [#allocation3], 0
      %s21 = sshll.u32 %s0, 4
      %s22 = int_to_ptr.hbm [resolvable:$true] %s21
      %s23 = sshll.u32 [#allocation2], 4
      %s24 = int_to_ptr.vmem [resolvable:$true] %s23
      %26 = dma.hbm_to_vmem [thread:$0]  %s22, 64, %s24, [#allocation3]
    $region5: #{tpu_custom_call.1} parent=1 // pred_fallthru
      _
    // Predicated region
    $region6: #{tpu_custom_call.1} parent=1 // pred_check
      _
    $region7: #{tpu_custom_call.1} parent=1 // pred_check_branch
      %28 = sbr.rel (0) target = $region9
    $region8: #{tpu_custom_call.1} parent=1 // pred_region
      %30 = vsyncadd [#allocation6], 0
      %s31 = sshll.u32 %s1, 4
      %s32 = int_to_ptr.hbm [resolvable:$true] %s31
      %s33 = sshll.u32 [#allocation5], 4
      %s34 = int_to_ptr.vmem [resolvable:$true] %s33
      %39 = dma.hbm_to_vmem [thread:$0]  %s32, 192, %s34, [#allocation6], 64, 64, 4
    $region9: #{tpu_custom_call.1} parent=1 // pred_fallthru
      _
    // Predicated region
    $region10: #{tpu_custom_call.1} parent=1 // pred_check
      _
    $region11: #{tpu_custom_call.1} parent=1 // pred_check_branch
      %41 = sbr.rel (0) target = $region13
    $region12: #{tpu_custom_call.1} parent=1 // pred_region
      _
    $region13: #{tpu_custom_call.1} parent=1 // pred_fallthru
      _
    // Predicated region
    $region14: #{tpu_custom_call.1} parent=1 // pred_check
      _
    $region15: #{tpu_custom_call.1} parent=1 // pred_check_branch
      %43 = sbr.rel (0) target = $region17
    $region16: #{tpu_custom_call.1} parent=1 // pred_region
      %45 = vsyncadd [#allocation6], 0
      %s46 = sshll.u32 %s3, 4
      %s47 = int_to_ptr.hbm [resolvable:$true] %s46
      %s48 = sshll.u32 [#allocation7], 4
      %s49 = int_to_ptr.vmem [resolvable:$true] %s48
      %54 = dma.hbm_to_vmem [thread:$0]  %s47, 256, %s49, [#allocation6], 64, 64, 4
    $region17: #{tpu_custom_call.1} parent=1 // pred_fallthru
      _
    // Predicated region
    $region18: #{tpu_custom_call.1} parent=1 // pred_check
      _
    $region19: #{tpu_custom_call.1} parent=1 // pred_check_branch
      %56 = sbr.rel (0) target = $region21
    $region20: #{tpu_custom_call.1} parent=1 // pred_region
      _
    $region21: #{tpu_custom_call.1} parent=1 // pred_fallthru
      _
    // Predicated region
    $region22: #{tpu_custom_call.1} parent=1 // pred_check
      _
    $region23: #{tpu_custom_call.1} parent=1 // pred_check_branch
      %58 = sbr.rel (0) target = $region25
    $region24: #{tpu_custom_call.1} parent=1 // pred_region
      %60 = vsyncadd [#allocation9], 0
      %s61 = sshll.u32 %s5, 4
      %s62 = int_to_ptr.hbm [resolvable:$true] %s61
      %s63 = sshll.u32 [#allocation8], 4
      %s64 = int_to_ptr.vmem [resolvable:$true] %s63
      %69 = dma.hbm_to_vmem [thread:$0]  %s62, 256, %s64, [#allocation9], 64, 64, 4
    $region25: #{tpu_custom_call.1} parent=1 // pred_fallthru
      _
    // Predicated region
    $region26: #{tpu_custom_call.1} parent=1 // pred_check
      _
    $region27: #{tpu_custom_call.1} parent=1 // pred_check_branch
      %71 = sbr.rel (0) target = $region29
    $region28: #{tpu_custom_call.1} parent=1 // pred_region
      _
    $region29: #{tpu_custom_call.1} parent=1 // pred_fallthru
      _
    // Predicated region
    $region30: #{tpu_custom_call.1} parent=1 // pred_check
      _
    $region31: #{tpu_custom_call.1} parent=1 // pred_check_branch
      %73 = sbr.rel (0) target = $region33
    $region32: #{tpu_custom_call.1} parent=1 // pred_region
      %75 = dma.done [#allocation3], 64
    $region33: #{tpu_custom_call.1} parent=1 // pred_fallthru
      _
    // Predicated region
    $region34: #{tpu_custom_call.1} parent=1 // pred_check
      _
    $region35: #{tpu_custom_call.1} parent=1 // pred_check_branch
      %77 = sbr.rel (0) target = $region37
    $region36: #{tpu_custom_call.1} parent=1 // pred_region
      %79 = dma.done [#allocation6], 192
    $region37: #{tpu_custom_call.1} parent=1 // pred_fallthru
      _
    // Predicated region
    $region38: #{tpu_custom_call.1} parent=1 // pred_check
      _
    $region39: #{tpu_custom_call.1} parent=1 // pred_check_branch
      %81 = sbr.rel (0) target = $region41
    $region40: #{tpu_custom_call.1} parent=1 // pred_region
      %83 = dma.done [#allocation6], 256
    $region41: #{tpu_custom_call.1} parent=1 // pred_fallthru
      _
    // Predicated region
    $region42: #{tpu_custom_call.1} parent=1 // pred_check
      _
    $region43: #{tpu_custom_call.1} parent=1 // pred_check_branch
      %85 = sbr.rel (0) target = $region45
    $region44: #{tpu_custom_call.1} parent=1 // pred_region
      %87 = dma.done [#allocation9], 256
    $region45: #{tpu_custom_call.1} parent=1 // pred_fallthru
      _
    %v89 = vld [vmem:[#allocation2] sm:$0xf]
    %v90 = vld [vmem:[#allocation5] sm:$0xf]
    %v91 = vld [vmem:[#allocation5 + $0x4] sm:$0xf]
    %v92 = vld [vmem:[#allocation5 + $0x8] sm:$0xf]
    %v93 = vld [vmem:[%s2] sm:$0x1]
    %v95 = vperm.slane %v93, 0
    %v100 = vunpack.c.l.b16 %v90
    %v101 = vunpack.c.l.b16 %v91
    %v102 = vunpack.c.l.b16 %v92
    %v103 = vpack.c.b16 %v101, %v100
    %v104 = vpack.c.b16 %v102, %v102
    %vm106 = vcmask 195584
    %v108 = vsel %vm106, %v89, 0
    %vm110 = vcmask 1043456
    %v112 = vsel %vm110, %v104, 0
    %114 = vmatpush.bf16.msra.mxu0 0
    %115 = vmatpush.bf16.msra.mxu0 0
    %116 = vmatpush.bf16.msra.mxu0 0
    %117 = vmatpush.bf16.msra.mxu0 0
    %118 = vmatpush.bf16.msra.mxu0 0
    %119 = vmatpush.bf16.msra.mxu0 0
    %120 = vmatpush.bf16.msra.mxu0 %v112
    %121 = vmatpush.bf16.msra.mxu0 %v103
    %122 = vmatmul.bf16.gmra.mxu0 %v108
    %v123 = vpop.f32.mrf.mxu0
    %v124 = vadd.f32 %v95, %v123
    %v125 = vpop.f32.mrf.mxu0
    %126 = vdwg.mxu0
    %v127 = vmax.f32 %v124, 0.0
    %v128 = vpack.c.bf16 %v127, %v127
    %v129 = vld [vmem:[#allocation7] sm:$0xf]
    %v130 = vld [vmem:[#allocation7 + $0x4] sm:$0xf]
    %v131 = vld [vmem:[#allocation7 + $0x8] sm:$0xf]
    %v132 = vld [vmem:[#allocation7 + $0xc] sm:$0xf]
    %v133 = vld [vmem:[%s4] sm:$0x1]
    %v135 = vperm.slane %v133, 0
    %v141 = vunpack.c.l.b16 %v129
    %v142 = vunpack.c.l.b16 %v130
    %v143 = vunpack.c.l.b16 %v131
    %v144 = vunpack.c.l.b16 %v132
    %v145 = vpack.c.b16 %v142, %v141
    %v146 = vpack.c.b16 %v144, %v143
    %vm149 = vcmask 261120
    %v151 = vsel %vm149, %v128, 0
    %153 = vmatpush.bf16.msra.mxu0 0
    %154 = vmatpush.bf16.msra.mxu0 0
    %155 = vmatpush.bf16.msra.mxu0 0
    %156 = vmatpush.bf16.msra.mxu0 0
    %157 = vmatpush.bf16.msra.mxu0 0
    %158 = vmatpush.bf16.msra.mxu0 0
    %159 = vmatpush.bf16.msra.mxu0 %v146
    %160 = vmatpush.bf16.msra.mxu0 %v145
    %161 = vmatmul.bf16.gmra.mxu0 %v151
    %v162 = vpop.f32.mrf.mxu0
    %v163 = vadd.f32 %v135, %v162
    %v164 = vpop.f32.mrf.mxu0
    %165 = vdwg.mxu0
    %v166 = vmax.f32 %v163, 0.0
    %v167 = vpack.c.bf16 %v166, %v166
    %v168 = vld [vmem:[#allocation8] sm:$0xf]
    %v169 = vld [vmem:[#allocation8 + $0x4] sm:$0xf]
    %v170 = vld [vmem:[#allocation8 + $0x8] sm:$0xf]
    %v171 = vld [vmem:[#allocation8 + $0xc] sm:$0xf]
    %v172 = vld [vmem:[%s6] sm:$0x1]
    %v174 = vperm.slane %v172, 0
    %v180 = vunpack.c.l.b16 %v168
    %v181 = vunpack.c.l.b16 %v169
    %v182 = vunpack.c.l.b16 %v170
    %v183 = vunpack.c.l.b16 %v171
    %v184 = vpack.c.b16 %v181, %v180
    %v185 = vpack.c.b16 %v183, %v182
    %v189 = vsel %vm149, %v167, 0
    %191 = vmatpush.bf16.msra.mxu0 0
    %192 = vmatpush.bf16.msra.mxu0 0
    %193 = vmatpush.bf16.msra.mxu0 0
    %194 = vmatpush.bf16.msra.mxu0 0
    %195 = vmatpush.bf16.msra.mxu0 0
    %196 = vmatpush.bf16.msra.mxu0 0
    %197 = vmatpush.bf16.msra.mxu0 %v185
    %198 = vmatpush.bf16.msra.mxu0 %v184
    %199 = vmatmul.bf16.gmra.mxu0 %v189
    %v200 = vpop.f32.mrf.mxu0
    %v201 = vadd.f32 %v174, %v200
    %v202 = vpop.f32.mrf.mxu0
    %203 = vdwg.mxu0
    %204 = vst [vmem:[#allocation10] sm:$0xff] %v201
    // Predicated region
    $region46: #{tpu_custom_call.1} parent=1 // pred_check
      _
    $region47: #{tpu_custom_call.1} parent=1 // pred_check_branch
      %206 = sbr.rel (0) target = $region49
    $region48: #{tpu_custom_call.1} parent=1 // pred_region
      %208 = vsyncadd [#allocation4], 0
      %s210 = sshll.u32 [#allocation10], 4
      %s211 = int_to_ptr.vmem [resolvable:$true] %s210
      %s212 = sshll.u32 %s7, 4
      %s213 = int_to_ptr.hbm [resolvable:$true] %s212
      %215 = dma.vmem_to_hbm [thread:$0]  %s211, 128, %s213, [#allocation4]
    $region49: #{tpu_custom_call.1} parent=1 // pred_fallthru
      _
    // Predicated region
    $region50: #{tpu_custom_call.1} parent=1 // pred_check
      _
    $region51: #{tpu_custom_call.1} parent=1 // pred_check_branch
      %217 = sbr.rel (0) target = $region53
    $region52: #{tpu_custom_call.1} parent=1 // pred_region
      %219 = dma.done [#allocation4], 128
    $region53: #{tpu_custom_call.1} parent=1 // pred_fallthru
      _
    %220 = vsyncpa [#allocation3], 1
    %221 = vsyncpa [#allocation6], 1
    %222 = vsyncpa [#allocation9], 1
    %223 = vsyncpa [#allocation4], 1

</llo_original>
